<compile_context>
chip_gen: v5e
topology: v5e:2x2
jax: 0.10.0
libtpu: 0.0.40
codegen_flags: <defaults>
</compile_context>

<pallas_src>
import functools

import jax
import jax.numpy as jnp
from jax.experimental import pallas as pl
from jax.experimental.pallas import tpu as pltpu

_LANES = 128
_SUBLANES = 8
# 4096 rows x 128 lanes x 4 B = 2 MiB per input block -> ~3 us per grid step,
# so the ~0.35 us per-step pipeline overhead stays ~10%.
_MAX_BLOCK_ROWS = 4096


def _elastic_partial_kernel(x_ref, t_ref, l1_ref, l2_ref, *,
                            block_rows, valid_rows, needs_mask):
    """Per-block partial sums of |x - t| and (x - t)^2.

    x_ref/t_ref: (block_rows, 128) input tiles.
    l1_ref/l2_ref: (8, 128) per-block partial-sum tiles.
    """
    x = x_ref[...].astype(jnp.float32)
    t = t_ref[...].astype(jnp.float32)
    d = x - t

    if needs_mask:
        # Last grid block extends past the array: those rows hold garbage
        # (stale VMEM), so zero them before reducing.  Zero-padded rows inside
        # `valid_rows` already contribute 0 to both sums and need no masking.
        row0 = pl.program_id(0) * block_rows
        row_ids = row0 + jax.lax.broadcasted_iota(
            jnp.int32, (block_rows, _LANES), 0)
        d = jnp.where(row_ids < valid_rows, d, 0.0)

    abs_d = jnp.abs(d)
    sq_d = d * d

    # (block_rows, 128) -> (block_rows//8, 8, 128): splits the sublane axis only
    # (layout preserving), so the axis-0 reduction is plain full-vreg VALU adds
    # (no XLU cross-lane work inside the hot loop).
    groups = block_rows // _SUBLANES
    l1_ref[...] = jnp.sum(abs_d.reshape(groups, _SUBLANES, _LANES), axis=0)
    l2_ref[...] = jnp.sum(sq_d.reshape(groups, _SUBLANES, _LANES), axis=0)


def _elastic_loss_single(x, target, a, *, max_block_rows=_MAX_BLOCK_ROWS):
    x = jnp.squeeze(x)
    t = jnp.squeeze(target)
    assert x.shape == t.shape, (x.shape, t.shape)

    n = x.size
    xf = x.reshape(-1)
    tf = t.reshape(-1)

    # Lane-dense layout: (rows, 128) with rows a multiple of 8 — pad the flat
    # length only up to the next multiple of 1024 (large, nicely-sized tensors
    # avoid the full-array pad copy entirely).
    rows = pl.cdiv(n, _SUBLANES * _LANES) * _SUBLANES
    padded_n = rows * _LANES
    if padded_n != n:
        xf = jnp.pad(xf, (0, padded_n - n))  # zeros -> contribute 0 to both sums
        tf = jnp.pad(tf, (0, padded_n - n))
    X = xf.reshape(rows, _LANES)
    T = tf.reshape(rows, _LANES)

    tr = min(max_block_rows, rows)
    n_blocks = pl.cdiv(rows, tr)
    needs_mask = (rows % tr) != 0  # last block reads past the array end
    out_rows = n_blocks * _SUBLANES

    bytes_accessed = (X.size * X.dtype.itemsize + T.size * T.dtype.itemsize
                      + 2 * out_rows * _LANES * 4)

    kernel = functools.partial(
        _elastic_partial_kernel,
        block_rows=tr, valid_rows=rows, needs_mask=needs_mask)

    l1_part, l2_part = pl.pallas_call(
        kernel,
        out_shape=(
            jax.ShapeDtypeStruct((out_rows, _LANES), jnp.float32),
            jax.ShapeDtypeStruct((out_rows, _LANES), jnp.float32),
        ),
        grid_spec=pl.GridSpec(
            grid=(n_blocks,),
            in_specs=[
                pl.BlockSpec((tr, _LANES), lambda i: (i, 0)),
                pl.BlockSpec((tr, _LANES), lambda i: (i, 0)),
            ],
            out_specs=(
                pl.BlockSpec((_SUBLANES, _LANES), lambda i: (i, 0)),
                pl.BlockSpec((_SUBLANES, _LANES), lambda i: (i, 0)),
            ),
        ),
        compiler_params=pltpu.CompilerParams(
            dimension_semantics=("parallel",),  # shard blocks across TCs on v7x
        ),
        cost_estimate=pl.CostEstimate(
            flops=6 * padded_n,
            transcendentals=0,
            bytes_accessed=int(bytes_accessed),
        ),
    )(X, T)

    inv_n = jnp.float32(1.0 / n)  # mean over the *original* element count
    l1_mean = jnp.sum(l1_part) * inv_n
    l2_mean = jnp.sum(l2_part) * inv_n
    return l2_mean * jnp.float32(a) + l1_mean * jnp.float32(1.0 - a)


def elastic_loss(inputs, target, a=0.2, *, max_block_rows=_MAX_BLOCK_ROWS):
    """Matches ElasticLoss.forward (reduction='mean').

    For tuple inputs the PyTorch loop overwrites `loss` every iteration, so the
    result only depends on the last element — compute just that one.
    """
    if not isinstance(inputs, (tuple, list)):
        inputs = (inputs,)
    return _elastic_loss_single(inputs[-1], target, a,
                                max_block_rows=max_block_rows)


def _reference(inputs, target, a=0.2):
    if not isinstance(inputs, (tuple, list)):
        inputs = (inputs,)
    loss = None
    for x in inputs:
        d = (jnp.squeeze(x).astype(jnp.float32)
             - jnp.squeeze(target).astype(jnp.float32))
        loss = jnp.mean(d * d) * a + jnp.mean(jnp.abs(d)) * (1.0 - a)
    return loss


if __name__ == "__main__":
    key = jax.random.PRNGKey(0)
    k1, k2, k3, k4 = jax.random.split(key, 4)

    # Main case: (2, 4, 16, 16) f32 — no padding, single block.
    x = jax.random.normal(k1, (2, 4, 16, 16), dtype=jnp.float32)
    t = jax.random.normal(k2, (2, 4, 16, 16), dtype=jnp.float32)
    out = elastic_loss(x, t, a=0.2)
    jax.block_until_ready(out)
    ref = _reference(x, t, a=0.2)
    assert jnp.allclose(out, ref, rtol=1e-5, atol=1e-5), (out, ref)

    # Awkward-size tuple input (exercises zero-pad + masked boundary block,
    # and the "last tuple element wins" semantics).
    x2a = jax.random.normal(k3, (4, 625), dtype=jnp.float32)
    x2b = jax.random.normal(k4, (4, 625), dtype=jnp.float32)
    t2 = jax.random.normal(k2, (4, 625), dtype=jnp.float32)
    out2 = elastic_loss((x2a, x2b), t2, a=0.3, max_block_rows=16)
    jax.block_until_ready(out2)
    ref2 = _reference((x2a, x2b), t2, a=0.3)
    assert jnp.allclose(out2, ref2, rtol=1e-5, atol=1e-5), (out2, ref2)

    print("KERNEL_OK")
</pallas_src>

<mosaic_0001>
module attributes {stable_mosaic.version = 11 : i64} {
  func.func @_elastic_partial_kernel(%arg0: i32, %arg1: memref<16x128xf32, #tpu.memory_space<vmem>>, %arg2: memref<16x128xf32, #tpu.memory_space<vmem>>, %arg3: memref<8x128xf32, #tpu.memory_space<vmem>>, %arg4: memref<8x128xf32, #tpu.memory_space<vmem>>) attributes {dimension_semantics = [#tpu.dimension_semantics<parallel>], iteration_bounds = array<i64: 1>, scalar_prefetch = 0 : i64, scratch_operands = 0 : i64, tpu.core_type = #tpu.core_type<tc>, window_params = [{transform_indices = @transform_0, window_bounds = array<i64: 16, 128>}, {transform_indices = @transform_1, window_bounds = array<i64: 16, 128>}, {transform_indices = @transform_2, window_bounds = array<i64: 8, 128>}, {transform_indices = @transform_3, window_bounds = array<i64: 8, 128>}]} {
    %c0 = arith.constant 0 : index
    %c0_0 = arith.constant 0 : index
    %0 = vector.load %arg1[%c0, %c0_0] : memref<16x128xf32, #tpu.memory_space<vmem>>, vector<16x128xf32>
    %c0_1 = arith.constant 0 : index
    %c0_2 = arith.constant 0 : index
    %1 = vector.load %arg2[%c0_1, %c0_2] : memref<16x128xf32, #tpu.memory_space<vmem>>, vector<16x128xf32>
    %2 = arith.subf %0, %1 : vector<16x128xf32>
    %3 = math.absf %2 : vector<16x128xf32>
    %4 = arith.mulf %2, %2 : vector<16x128xf32>
    %5 = vector.shape_cast %3 : vector<16x128xf32> to vector<2x8x128xf32>
    %cst = arith.constant dense<0.000000e+00> : vector<8x128xf32>
    %6 = vector.multi_reduction <add>, %5, %cst [0] : vector<2x8x128xf32> to vector<8x128xf32>
    %c0_3 = arith.constant 0 : index
    %c0_4 = arith.constant 0 : index
    %7 = vector.load %arg3[%c0_3, %c0_4] : memref<8x128xf32, #tpu.memory_space<vmem>>, vector<8x128xf32>
    tpu.vector_store %arg3[%c0_3, %c0_4], %6 {strides = array<i32>} : memref<8x128xf32, #tpu.memory_space<vmem>>, vector<8x128xf32>,
    %8 = vector.shape_cast %4 : vector<16x128xf32> to vector<2x8x128xf32>
    %cst_5 = arith.constant dense<0.000000e+00> : vector<8x128xf32>
    %9 = vector.multi_reduction <add>, %8, %cst_5 [0] : vector<2x8x128xf32> to vector<8x128xf32>
    %c0_6 = arith.constant 0 : index
    %c0_7 = arith.constant 0 : index
    %10 = vector.load %arg4[%c0_6, %c0_7] : memref<8x128xf32, #tpu.memory_space<vmem>>, vector<8x128xf32>
    tpu.vector_store %arg4[%c0_6, %c0_7], %9 {strides = array<i32>} : memref<8x128xf32, #tpu.memory_space<vmem>>, vector<8x128xf32>,
    return
  }
  func.func @transform_0(%arg0: i32) -> (i32, i32) {
    %c0_i32 = arith.constant 0 : i32
    %c0_i32_0 = arith.constant 0 : i32
    return %arg0, %c0_i32 : i32, i32
  }
  func.func @transform_1(%arg0: i32) -> (i32, i32) {
    %c0_i32 = arith.constant 0 : i32
    %c0_i32_0 = arith.constant 0 : i32
    return %arg0, %c0_i32 : i32, i32
  }
  func.func @transform_2(%arg0: i32) -> (i32, i32) {
    %c0_i32 = arith.constant 0 : i32
    %c0_i32_0 = arith.constant 0 : i32
    return %arg0, %c0_i32 : i32, i32
  }
  func.func @transform_3(%arg0: i32) -> (i32, i32) {
    %c0_i32 = arith.constant 0 : i32
    %c0_i32_0 = arith.constant 0 : i32
    return %arg0, %c0_i32 : i32, i32
  }
}

</mosaic_0001>

<llo_original>
// kernel: tpu_custom_call.1
$region0: #{tpu_custom_call.1}
  #allocation0 [shape = 'u32[]', space=smem, size = 0x4, offset = 0x4, fixed_abs, tag = 'smem constant byte address 0x4 - core index']
  #allocation1 [shape = 'u32[72,128]{1,0:T(1,128)}', space=vmem, size = 0x9000, scoped, tag = 'internal scratch']
  %s0 = inlined_call_operand.hbm [shape: f32[16,128], index: 0, kind: input, shape index: {}]
  %s1 = inlined_call_operand.hbm [shape: f32[16,128], index: 1, kind: input, shape index: {}]
  %s2 = inlined_call_operand.hbm [shape: f32[8,128], index: 2, kind: output, shape index: {0}]
  %s3 = inlined_call_operand.hbm [shape: f32[8,128], index: 3, kind: output, shape index: {1}]
  %4 = xla_tuple %s2, %s3
  %s5 = sld [smem:[#allocation0]]
  $region34: #{tpu_custom_call.1} parent=0
    _
  %s7 = ssub.s32 1, %s5
  %s8 = scalar_select 0, %s7, %s5
  $region1: #{tpu_custom_call.1} parent=0
    #allocation2 [shape = 'u8[8192]{0}', space=vmem, size = 0x2000, scoped, tag = 'input window, operand 0, single buffered']
    #allocation3 [shape = 's32[1]{0}', space=sflag, size = 0x4, scoped, tag = 'scoped memory for tpu_custom_call.1']
    #allocation4 [shape = 's32[1]{0}', space=sflag, size = 0x4, scoped, tag = 'scoped memory for tpu_custom_call.1']
    #allocation5 [shape = 'u8[8192]{0}', space=vmem, size = 0x2000, scoped, tag = 'input window, operand 1, single buffered']
    #allocation6 [shape = 's32[1]{0}', space=sflag, size = 0x4, scoped, tag = 'scoped memory for tpu_custom_call.1']
    #allocation7 [shape = 'u8[4096]{0}', space=vmem, size = 0x1000, scoped, tag = 'output window, operand 0, single buffered']
    #allocation8 [shape = 'u8[4096]{0}', space=vmem, size = 0x1000, scoped, tag = 'output window, operand 1, single buffered']
    #allocation9 [shape = 's32[1]{0}', space=sflag, size = 0x4, scoped, tag = 'scoped memory for tpu_custom_call.1']
    %9 = vsyncpa [#allocation3], 0
    %10 = vsyncpa [#allocation6], 0
    %11 = vsyncpa [#allocation4], 0
    %12 = vsyncpa [#allocation9], 0
    // Predicated region
    $region2: #{tpu_custom_call.1} parent=1 // pred_check
      _
    $region3: #{tpu_custom_call.1} parent=1 // pred_check_branch
      %14 = sbr.rel (0) target = $region5
    $region4: #{tpu_custom_call.1} parent=1 // pred_region
      %16 = vsyncadd [#allocation3], 0
      %s17 = sshll.u32 %s0, 4
      %s18 = int_to_ptr.hbm [resolvable:$true] %s17
      %s19 = sshll.u32 [#allocation2], 4
      %s20 = int_to_ptr.vmem [resolvable:$true] %s19
      %25 = dma.hbm_to_vmem [thread:$0]  %s18, 256, %s20, [#allocation3], 128, 128, 8
    $region5: #{tpu_custom_call.1} parent=1 // pred_fallthru
      _
    // Predicated region
    $region6: #{tpu_custom_call.1} parent=1 // pred_check
      _
    $region7: #{tpu_custom_call.1} parent=1 // pred_check_branch
      %27 = sbr.rel (0) target = $region9
    $region8: #{tpu_custom_call.1} parent=1 // pred_region
      %29 = vsyncadd [#allocation6], 0
      %s30 = sshll.u32 %s1, 4
      %s31 = int_to_ptr.hbm [resolvable:$true] %s30
      %s32 = sshll.u32 [#allocation5], 4
      %s33 = int_to_ptr.vmem [resolvable:$true] %s32
      %38 = dma.hbm_to_vmem [thread:$0]  %s31, 256, %s33, [#allocation6], 128, 128, 8
    $region9: #{tpu_custom_call.1} parent=1 // pred_fallthru
      _
    // Predicated region
    $region10: #{tpu_custom_call.1} parent=1 // pred_check
      _
    $region11: #{tpu_custom_call.1} parent=1 // pred_check_branch
      %40 = sbr.rel (0) target = $region13
    $region12: #{tpu_custom_call.1} parent=1 // pred_region
      %42 = dma.done [#allocation3], 256
    $region13: #{tpu_custom_call.1} parent=1 // pred_fallthru
      _
    // Predicated region
    $region14: #{tpu_custom_call.1} parent=1 // pred_check
      _
    $region15: #{tpu_custom_call.1} parent=1 // pred_check_branch
      %44 = sbr.rel (0) target = $region17
    $region16: #{tpu_custom_call.1} parent=1 // pred_region
      %46 = dma.done [#allocation6], 256
    $region17: #{tpu_custom_call.1} parent=1 // pred_fallthru
      _
    %v47 = vld [vmem:[#allocation2] sm:$0xff]
    %v48 = vld [vmem:[#allocation2 + $0x8] sm:$0xff]
    %v49 = vld [vmem:[#allocation5] sm:$0xff]
    %v50 = vld [vmem:[#allocation5 + $0x8] sm:$0xff]
    %v51 = vsub.f32 %v47, %v49
    %v52 = vsub.f32 %v48, %v50
    %v53 = vand.u32 2147483647, %v51
    %v54 = vand.u32 2147483647, %v52
    %v55 = vmul.f32 %v51, %v51
    %v56 = vmul.f32 %v52, %v52
    %v57 = vadd.f32 %v53, %v54
    %58 = vst [vmem:[#allocation7] sm:$0xff] %v57
    %v59 = vadd.f32 %v55, %v56
    %60 = vst [vmem:[#allocation8] sm:$0xff] %v59
    // Predicated region
    $region18: #{tpu_custom_call.1} parent=1 // pred_check
      _
    $region19: #{tpu_custom_call.1} parent=1 // pred_check_branch
      %62 = sbr.rel (0) target = $region21
    $region20: #{tpu_custom_call.1} parent=1 // pred_region
      %64 = vsyncadd [#allocation4], 0
      %s66 = sshll.u32 [#allocation7], 4
      %s67 = int_to_ptr.vmem [resolvable:$true] %s66
      %s68 = sshll.u32 %s2, 4
      %s69 = int_to_ptr.hbm [resolvable:$true] %s68
      %71 = dma.vmem_to_hbm [thread:$0]  %s67, 128, %s69, [#allocation4]
    $region21: #{tpu_custom_call.1} parent=1 // pred_fallthru
      _
    // Predicated region
    $region22: #{tpu_custom_call.1} parent=1 // pred_check
      _
    $region23: #{tpu_custom_call.1} parent=1 // pred_check_branch
      %73 = sbr.rel (0) target = $region25
    $region24: #{tpu_custom_call.1} parent=1 // pred_region
      %75 = vsyncadd [#allocation9], 0
      %s77 = sshll.u32 [#allocation8], 4
      %s78 = int_to_ptr.vmem [resolvable:$true] %s77
      %s79 = sshll.u32 %s3, 4
      %s80 = int_to_ptr.hbm [resolvable:$true] %s79
      %82 = dma.vmem_to_hbm [thread:$0]  %s78, 128, %s80, [#allocation9]
    $region25: #{tpu_custom_call.1} parent=1 // pred_fallthru
      _
    // Predicated region
    $region26: #{tpu_custom_call.1} parent=1 // pred_check
      _
    $region27: #{tpu_custom_call.1} parent=1 // pred_check_branch
      %84 = sbr.rel (0) target = $region29
    $region28: #{tpu_custom_call.1} parent=1 // pred_region
      %86 = dma.done [#allocation4], 128
    $region29: #{tpu_custom_call.1} parent=1 // pred_fallthru
      _
    // Predicated region
    $region30: #{tpu_custom_call.1} parent=1 // pred_check
      _
    $region31: #{tpu_custom_call.1} parent=1 // pred_check_branch
      %88 = sbr.rel (0) target = $region33
    $region32: #{tpu_custom_call.1} parent=1 // pred_region
      %90 = dma.done [#allocation9], 128
    $region33: #{tpu_custom_call.1} parent=1 // pred_fallthru
      _
    %91 = vsyncpa [#allocation3], 1
    %92 = vsyncpa [#allocation6], 1
    %93 = vsyncpa [#allocation4], 1
    %94 = vsyncpa [#allocation9], 1

</llo_original>
